<compile_context>
chip_gen: v5e
topology: v5e:2x2
jax: 0.10.0
libtpu: 0.0.40
codegen_flags: <defaults>
</compile_context>

<pallas_src>
import functools

import jax
import jax.numpy as jnp
from jax.experimental import pallas as pl
from jax.experimental.pallas import tpu as pltpu

LATENT = 20
HIDDEN = 400
OUT = 784


def _decoder_kernel(x_ref, w1_ref, b1_ref, w2_ref, b2_ref, o_ref):
    # fc1 + ReLU  (bf16 operands on the MXU, f32 accumulation)
    x = x_ref[...]                                          # (TB, 20) bf16
    h = jnp.dot(x, w1_ref[...],
                preferred_element_type=jnp.float32)         # (TB, 400) f32
    h = jnp.maximum(h + b1_ref[...], 0.0)                   # bias + ReLU (f32)

    # fc2 + Sigmoid
    y = jnp.dot(h.astype(jnp.bfloat16), w2_ref[...],
                preferred_element_type=jnp.float32)         # (TB, 784) f32
    z = y + b2_ref[...]
    # sigmoid(z) = 1 / (1 + exp(-z)); reciprocal goes to the EUP slot.
    z = jnp.clip(z, -30.0, 30.0)                            # keep exp finite
    s = pl.reciprocal(1.0 + jnp.exp(-z), approx=True)
    o_ref[...] = s.astype(o_ref.dtype)


def _pick_tb(batch):
    """Largest batch tile <= 1024 (v5e 16 MiB scoped-VMEM safe) that doesn't
    over-pad small batches; prefers >= 2 tiles at mid-size batches so v7x's
    two TensorCores both get grid steps."""
    if batch >= 2048:
        return 1024
    if batch >= 1024:
        return 512
    if batch >= 512:
        return 256
    if batch >= 128:
        return 128
    # Tiny batches: pad only to a sublane multiple.
    return max(8, ((batch + 7) // 8) * 8)


@functools.partial(jax.jit, static_argnames=("tb", "out_dtype"))
def decoder_forward(x, w1, b1, w2, b2, *, tb=None, out_dtype=jnp.bfloat16):
    """x: (B, 20) float32. w1: (20, 400) bf16, w2: (400, 784) bf16 (already
    transposed vs. PyTorch so the kernel computes x @ W). b1/b2: (1, F) f32.
    Returns (B, 784) in `out_dtype` (bfloat16 by default; pass
    out_dtype=jnp.float32 for full-precision stores)."""
    B = x.shape[0]
    if tb is None:
        tb = _pick_tb(B)
    num_tiles = pl.cdiv(B, tb)
    b_pad = num_tiles * tb

    # Pad the batch with a single pad op; padded rows are dropped below.
    x_p = x.astype(jnp.bfloat16)
    if b_pad != B:
        x_p = jnp.pad(x_p, ((0, b_pad - B), (0, 0)))

    out = pl.pallas_call(
        _decoder_kernel,
        out_shape=jax.ShapeDtypeStruct((b_pad, OUT), out_dtype),
        grid=(num_tiles,),
        in_specs=[
            # Activation tiles stream over the batch grid axis.
            pl.BlockSpec((tb, LATENT), lambda i: (i, 0)),
            # Weights / biases: constant block index -> VMEM-resident, one DMA.
            pl.BlockSpec((LATENT, HIDDEN), lambda i: (0, 0)),
            pl.BlockSpec((1, HIDDEN), lambda i: (0, 0)),
            pl.BlockSpec((HIDDEN, OUT), lambda i: (0, 0)),
            pl.BlockSpec((1, OUT), lambda i: (0, 0)),
        ],
        out_specs=pl.BlockSpec((tb, OUT), lambda i: (i, 0)),
        compiler_params=pltpu.CompilerParams(
            dimension_semantics=("parallel",)),
    )(x_p, w1, b1, w2, b2)

    return out[:B]


def init_params(key):
    """Deterministic parameter init (PyTorch-Linear-style uniform bounds).
    Weights stored transposed as (in_features, out_features) in bfloat16;
    biases stored as (1, F) float32."""
    k1, k2, k3, k4 = jax.random.split(key, 4)
    bound1 = 1.0 / jnp.sqrt(float(LATENT))
    bound2 = 1.0 / jnp.sqrt(float(HIDDEN))
    w1 = jax.random.uniform(k1, (LATENT, HIDDEN), jnp.float32,
                            -bound1, bound1).astype(jnp.bfloat16)
    b1 = jax.random.uniform(k2, (1, HIDDEN), jnp.float32, -bound1, bound1)
    w2 = jax.random.uniform(k3, (HIDDEN, OUT), jnp.float32,
                            -bound2, bound2).astype(jnp.bfloat16)
    b2 = jax.random.uniform(k4, (1, OUT), jnp.float32, -bound2, bound2)
    return w1, b1, w2, b2
    # TODO(synk): optional fp8 storage for w2 on v7x small-batch serving
    # (halves the one-time weight DMA) — left out to avoid quantization error.


def _reference(x, w1, b1, w2, b2):
    w1f = w1.astype(jnp.float32)
    w2f = w2.astype(jnp.float32)
    return jax.nn.sigmoid(jnp.maximum(x @ w1f + b1, 0.0) @ w2f + b2)


if __name__ == "__main__":
    key = jax.random.PRNGKey(0)
    k_params, k_x1, k_x2 = jax.random.split(key, 3)

    w1, b1, w2, b2 = init_params(k_params)

    # Small batch of latent codes, shape (B, 20) as the module's fc1 implies.
    B = 2
    x = jax.random.normal(k_x1, (B, LATENT), dtype=jnp.float32)

    out = decoder_forward(x, w1, b1, w2, b2)
    out = jax.block_until_ready(out)

    ref = _reference(x, w1, b1, w2, b2)
    assert out.shape == (B, OUT)
    assert out.dtype == jnp.bfloat16
    # Loosened tolerance: bf16 activations/weights + bf16 output + approx recip.
    assert jnp.allclose(out.astype(jnp.float32), ref, atol=2e-2, rtol=2e-2), \
        float(jnp.max(jnp.abs(out.astype(jnp.float32) - ref)))

    # Exercise a batch that needs padding + a larger tile, and the f32-output
    # path, to make sure both code paths compile and run.
    B2 = 130
    x2 = jax.random.normal(k_x2, (B2, LATENT), dtype=jnp.float32)
    out2 = decoder_forward(x2, w1, b1, w2, b2, out_dtype=jnp.float32)
    out2 = jax.block_until_ready(out2)
    ref2 = _reference(x2, w1, b1, w2, b2)
    assert out2.shape == (B2, OUT)
    assert out2.dtype == jnp.float32
    assert jnp.allclose(out2, ref2, atol=2e-2, rtol=2e-2), \
        float(jnp.max(jnp.abs(out2 - ref2)))

    print("KERNEL_OK")
</pallas_src>

<mosaic_0001>
module attributes {stable_mosaic.version = 11 : i64} {
  func.func @_decoder_kernel(%arg0: i32, %arg1: memref<8x20xbf16, #tpu.memory_space<vmem>>, %arg2: memref<20x400xbf16, #tpu.memory_space<vmem>>, %arg3: memref<1x400xf32, #tpu.memory_space<vmem>>, %arg4: memref<400x784xbf16, #tpu.memory_space<vmem>>, %arg5: memref<1x784xf32, #tpu.memory_space<vmem>>, %arg6: memref<8x784xbf16, #tpu.memory_space<vmem>>) attributes {dimension_semantics = [#tpu.dimension_semantics<parallel>], iteration_bounds = array<i64: 1>, scalar_prefetch = 0 : i64, scratch_operands = 0 : i64, tpu.core_type = #tpu.core_type<tc>, window_params = [{transform_indices = @transform_0, window_bounds = array<i64: 8, 20>}, {pipeline_mode = #tpu.pipeline_mode<synchronous>, transform_indices = @transform_1, window_bounds = array<i64: 20, 400>}, {pipeline_mode = #tpu.pipeline_mode<synchronous>, transform_indices = @transform_2, window_bounds = array<i64: 1, 400>}, {pipeline_mode = #tpu.pipeline_mode<synchronous>, transform_indices = @transform_3, window_bounds = array<i64: 400, 784>}, {pipeline_mode = #tpu.pipeline_mode<synchronous>, transform_indices = @transform_4, window_bounds = array<i64: 1, 784>}, {transform_indices = @transform_5, window_bounds = array<i64: 8, 784>}]} {
    %c0 = arith.constant 0 : index
    %c0_0 = arith.constant 0 : index
    %0 = vector.load %arg1[%c0, %c0_0] : memref<8x20xbf16, #tpu.memory_space<vmem>>, vector<8x20xbf16>
    %c0_1 = arith.constant 0 : index
    %c0_2 = arith.constant 0 : index
    %1 = vector.load %arg2[%c0_1, %c0_2] : memref<20x400xbf16, #tpu.memory_space<vmem>>, vector<20x400xbf16>
    %cst = arith.constant dense<0.000000e+00> : vector<8x400xf32>
    %2 = tpu.matmul %0, %1, %cst {dimension_numbers = #tpu.dot_dimension_numbers<[1], [0], [0], [1], [0, 0, 1, 1], [], []>} : vector<8x20xbf16>, vector<20x400xbf16>, vector<8x400xf32> -> vector<8x400xf32>
    %c0_3 = arith.constant 0 : index
    %c0_4 = arith.constant 0 : index
    %3 = vector.load %arg3[%c0_3, %c0_4] : memref<1x400xf32, #tpu.memory_space<vmem>>, vector<1x400xf32>
    %4 = vector.broadcast %3 : vector<1x400xf32> to vector<8x400xf32>
    %5 = arith.addf %2, %4 : vector<8x400xf32>
    %cst_5 = arith.constant 0.000000e+00 : f32
    %6 = vector.broadcast %cst_5 : f32 to vector<8x400xf32>
    %7 = arith.maximumf %5, %6 : vector<8x400xf32>
    %8 = arith.truncf %7 : vector<8x400xf32> to vector<8x400xbf16>
    %c0_6 = arith.constant 0 : index
    %c0_7 = arith.constant 0 : index
    %9 = vector.load %arg4[%c0_6, %c0_7] : memref<400x784xbf16, #tpu.memory_space<vmem>>, vector<400x784xbf16>
    %cst_8 = arith.constant dense<0.000000e+00> : vector<8x784xf32>
    %10 = tpu.matmul %8, %9, %cst_8 {dimension_numbers = #tpu.dot_dimension_numbers<[1], [0], [0], [1], [0, 0, 1, 1], [], []>} : vector<8x400xbf16>, vector<400x784xbf16>, vector<8x784xf32> -> vector<8x784xf32>
    %c0_9 = arith.constant 0 : index
    %c0_10 = arith.constant 0 : index
    %11 = vector.load %arg5[%c0_9, %c0_10] : memref<1x784xf32, #tpu.memory_space<vmem>>, vector<1x784xf32>
    %12 = vector.broadcast %11 : vector<1x784xf32> to vector<8x784xf32>
    %13 = arith.addf %10, %12 : vector<8x784xf32>
    %cst_11 = arith.constant -3.000000e+01 : f32
    %cst_12 = arith.constant 3.000000e+01 : f32
    %14 = vector.broadcast %cst_11 : f32 to vector<8x784xf32>
    %15 = arith.maximumf %14, %13 : vector<8x784xf32>
    %16 = vector.broadcast %cst_12 : f32 to vector<8x784xf32>
    %17 = arith.minimumf %16, %15 : vector<8x784xf32>
    %cst_13 = arith.constant 0.000000e+00 : f32
    %18 = vector.broadcast %cst_13 : f32 to vector<8x784xf32>
    %19 = arith.subf %18, %17 : vector<8x784xf32>
    %20 = math.exp %19 : vector<8x784xf32>
    %cst_14 = arith.constant 1.000000e+00 : f32
    %21 = vector.broadcast %cst_14 : f32 to vector<8x784xf32>
    %22 = arith.addf %21, %20 : vector<8x784xf32>
    %23 = tpu.reciprocal %22 {approx = true} : vector<8x784xf32> -> vector<8x784xf32>
    %24 = arith.truncf %23 : vector<8x784xf32> to vector<8x784xbf16>
    %c0_15 = arith.constant 0 : index
    %c0_16 = arith.constant 0 : index
    %25 = vector.load %arg6[%c0_15, %c0_16] : memref<8x784xbf16, #tpu.memory_space<vmem>>, vector<8x784xbf16>
    tpu.vector_store %arg6[%c0_15, %c0_16], %24 {strides = array<i32>} : memref<8x784xbf16, #tpu.memory_space<vmem>>, vector<8x784xbf16>,
    return
  }
  func.func @transform_0(%arg0: i32) -> (i32, i32) {
    %c0_i32 = arith.constant 0 : i32
    %c0_i32_0 = arith.constant 0 : i32
    return %arg0, %c0_i32 : i32, i32
  }
  func.func @transform_1(%arg0: i32) -> (i32, i32) {
    %c0_i32 = arith.constant 0 : i32
    %c0_i32_0 = arith.constant 0 : i32
    %c0_i32_1 = arith.constant 0 : i32
    return %c0_i32, %c0_i32_0 : i32, i32
  }
  func.func @transform_2(%arg0: i32) -> (i32, i32) {
    %c0_i32 = arith.constant 0 : i32
    %c0_i32_0 = arith.constant 0 : i32
    %c0_i32_1 = arith.constant 0 : i32
    return %c0_i32, %c0_i32_0 : i32, i32
  }
  func.func @transform_3(%arg0: i32) -> (i32, i32) {
    %c0_i32 = arith.constant 0 : i32
    %c0_i32_0 = arith.constant 0 : i32
    %c0_i32_1 = arith.constant 0 : i32
    return %c0_i32, %c0_i32_0 : i32, i32
  }
  func.func @transform_4(%arg0: i32) -> (i32, i32) {
    %c0_i32 = arith.constant 0 : i32
    %c0_i32_0 = arith.constant 0 : i32
    %c0_i32_1 = arith.constant 0 : i32
    return %c0_i32, %c0_i32_0 : i32, i32
  }
  func.func @transform_5(%arg0: i32) -> (i32, i32) {
    %c0_i32 = arith.constant 0 : i32
    %c0_i32_0 = arith.constant 0 : i32
    return %arg0, %c0_i32 : i32, i32
  }
}

</mosaic_0001>

<llo_original>
// kernel: decoder_forward.1
$region0: #{decoder_forward.1}
  #allocation0 [shape = 'u32[]', space=smem, size = 0x4, offset = 0x4, fixed_abs, tag = 'smem constant byte address 0x4 - core index']
  #allocation1 [shape = 'u32[72,128]{1,0:T(1,128)}', space=vmem, size = 0x9000, scoped, tag = 'internal scratch']
  %s0 = inlined_call_operand.vmem [shape: bf16[8,20], index: 0, kind: input, shape index: {}]
  %s1 = inlined_call_operand.hbm [shape: bf16[20,400], index: 1, kind: input, shape index: {}]
  %s2 = inlined_call_operand.vmem [shape: f32[1,400], index: 2, kind: input, shape index: {}]
  %s3 = inlined_call_operand.hbm [shape: bf16[400,784], index: 3, kind: input, shape index: {}]
  %s4 = inlined_call_operand.vmem [shape: f32[1,784], index: 4, kind: input, shape index: {}]
  %s5 = inlined_call_operand.vmem [shape: bf16[8,784], index: 5, kind: output, shape index: {}]
  %s6 = sld [smem:[#allocation0]]
  $region38: #{decoder_forward.1} parent=0
    _
  %s8 = ssub.s32 1, %s6
  %s9 = scalar_select 0, %s8, %s6
  $region1: #{decoder_forward.1} parent=0
    #allocation2 [shape = 'u8[24576]{0}', space=vmem, size = 0x6000, scoped, tag = 'input window, operand 1, single buffered']
    #allocation3 [shape = 's32[1]{0}', space=sflag, size = 0x4, scoped, tag = 'scoped memory for decoder_forward.1']
    #allocation4 [shape = 'u8[716800]{0}', space=vmem, size = 0xaf000, scoped, tag = 'input window, operand 3, single buffered']
    #allocation5 [shape = 's32[1]{0}', space=sflag, size = 0x4, scoped, tag = 'scoped memory for decoder_forward.1']
    %10 = vsyncpa [#allocation3], 0
    %11 = vsyncpa [#allocation5], 0
    // Predicated region
    $region2: #{decoder_forward.1} parent=1 // pred_check
      _
    $region3: #{decoder_forward.1} parent=1 // pred_check_branch
      %13 = sbr.rel (0) target = $region5
    $region4: #{decoder_forward.1} parent=1 // pred_region
      _
    $region5: #{decoder_forward.1} parent=1 // pred_fallthru
      _
    // Predicated region
    $region6: #{decoder_forward.1} parent=1 // pred_check
      _
    $region7: #{decoder_forward.1} parent=1 // pred_check_branch
      %15 = sbr.rel (0) target = $region9
    $region8: #{decoder_forward.1} parent=1 // pred_region
      %17 = vsyncadd [#allocation3], 0
      %s18 = sshll.u32 %s1, 4
      %s19 = int_to_ptr.hbm [resolvable:$true] %s18
      %s20 = sshll.u32 [#allocation2], 4
      %s21 = int_to_ptr.vmem [resolvable:$true] %s20
      %26 = dma.hbm_to_vmem [thread:$0]  %s19, 768, %s21, [#allocation3], 256, 256, 16
    $region9: #{decoder_forward.1} parent=1 // pred_fallthru
      _
    // Predicated region
    $region10: #{decoder_forward.1} parent=1 // pred_check
      _
    $region11: #{decoder_forward.1} parent=1 // pred_check_branch
      %28 = sbr.rel (0) target = $region13
    $region12: #{decoder_forward.1} parent=1 // pred_region
      _
    $region13: #{decoder_forward.1} parent=1 // pred_fallthru
      _
    // Predicated region
    $region14: #{decoder_forward.1} parent=1 // pred_check
      _
    $region15: #{decoder_forward.1} parent=1 // pred_check_branch
      %30 = sbr.rel (0) target = $region17
    $region16: #{decoder_forward.1} parent=1 // pred_region
      %32 = vsyncadd [#allocation5], 0
      %s33 = sshll.u32 %s3, 4
      %s34 = int_to_ptr.hbm [resolvable:$true] %s33
      %s35 = sshll.u32 [#allocation4], 4
      %s36 = int_to_ptr.vmem [resolvable:$true] %s35
      %41 = dma.hbm_to_vmem [thread:$0]  %s34, 22400, %s36, [#allocation5], 448, 448, 28
    $region17: #{decoder_forward.1} parent=1 // pred_fallthru
      _
    // Predicated region
    $region18: #{decoder_forward.1} parent=1 // pred_check
      _
    $region19: #{decoder_forward.1} parent=1 // pred_check_branch
      %43 = sbr.rel (0) target = $region21
    $region20: #{decoder_forward.1} parent=1 // pred_region
      _
    $region21: #{decoder_forward.1} parent=1 // pred_fallthru
      _
    // Predicated region
    $region22: #{decoder_forward.1} parent=1 // pred_check
      _
    $region23: #{decoder_forward.1} parent=1 // pred_check_branch
      %45 = sbr.rel (0) target = $region25
    $region24: #{decoder_forward.1} parent=1 // pred_region
      %47 = dma.done [#allocation3], 768
    $region25: #{decoder_forward.1} parent=1 // pred_fallthru
      _
    // Predicated region
    $region26: #{decoder_forward.1} parent=1 // pred_check
      _
    $region27: #{decoder_forward.1} parent=1 // pred_check_branch
      %49 = sbr.rel (0) target = $region29
    $region28: #{decoder_forward.1} parent=1 // pred_region
      %51 = dma.done [#allocation5], 22400
    $region29: #{decoder_forward.1} parent=1 // pred_fallthru
      _
    %v53 = vld [vmem:[%s0] sm:$0xf]
    %v54 = vld [vmem:[#allocation2] sm:$0xff]
    %v55 = vld [vmem:[#allocation2 + $0x8] sm:$0xff]
    %v56 = vld [vmem:[#allocation2 + $0x10] sm:$0xff]
    %v57 = vld [vmem:[#allocation2 + $0x18] sm:$0xff]
    %v58 = vld [vmem:[#allocation2 + $0x20] sm:$0x33]
    %v59 = vld [vmem:[#allocation2 + $0x28] sm:$0x33]
    %v60 = vld [vmem:[%s2] sm:$0xf]
    %v62 = vperm.slane %v60, 0
    %v63 = vperm.slane %v60, 1
    %v64 = vperm.slane %v60, 2
    %v65 = vperm.slane %v60, 3
    %v76 = vunpack.c.l.b16 %v54
    %v77 = vunpack.c.h.b16 %v54
    %v78 = vunpack.c.l.b16 %v55
    %v79 = vunpack.c.h.b16 %v55
    %v80 = vunpack.c.l.b16 %v56
    %v81 = vunpack.c.h.b16 %v56
    %v82 = vunpack.c.l.b16 %v57
    %v83 = vunpack.c.h.b16 %v57
    %v84 = vunpack.c.l.b16 %v58
    %v85 = vunpack.c.h.b16 %v58
    %v86 = vunpack.c.l.b16 %v59
    %v87 = vunpack.c.h.b16 %v59
    %v88 = vpack.c.b16 %v80, %v76
    %v89 = vpack.c.b16 %v81, %v77
    %v90 = vpack.c.b16 %v82, %v78
    %v91 = vpack.c.b16 %v83, %v79
    %v92 = vpack.c.b16 %v84, %v84
    %v93 = vpack.c.b16 %v85, %v85
    %v94 = vpack.c.b16 %v86, %v86
    %v95 = vpack.c.b16 %v87, %v87
    %vm100 = vcmask 162816
    %v102 = vsel %vm100, %v53, 0
    %vm104 = vcmask 1041408
    %v106 = vsel %vm104, %v92, 0
    %v109 = vsel %vm104, %v93, 0
    %v112 = vsel %vm104, %v94, 0
    %v115 = vsel %vm104, %v95, 0
    %117 = vmatpush.bf16.msra.mxu0 0
    %118 = vmatpush.bf16.msra.mxu0 0
    %119 = vmatpush.bf16.msra.mxu0 0
    %120 = vmatpush.bf16.msra.mxu0 0
    %121 = vmatpush.bf16.msra.mxu0 0
    %122 = vmatpush.bf16.msra.mxu0 0
    %123 = vmatpush.bf16.msra.mxu0 %v106
    %124 = vmatpush.bf16.msra.mxu0 %v88
    %125 = vmatmul.bf16.gmra.mxu0 %v102
    %v126 = vpop.f32.mrf.mxu0
    %v127 = vadd.f32 %v62, %v126
    %v128 = vpop.f32.mrf.mxu0
    %129 = vdwg.mxu0
    %130 = vmatpush.bf16.msra.mxu0 0
    %131 = vmatpush.bf16.msra.mxu0 0
    %132 = vmatpush.bf16.msra.mxu0 0
    %133 = vmatpush.bf16.msra.mxu0 0
    %134 = vmatpush.bf16.msra.mxu0 0
    %135 = vmatpush.bf16.msra.mxu0 0
    %136 = vmatpush.bf16.msra.mxu0 %v109
    %137 = vmatpush.bf16.msra.mxu0 %v89
    %138 = vmatmul.bf16.gmra.mxu0 %v102
    %v139 = vpop.f32.mrf.mxu0
    %v140 = vadd.f32 %v63, %v139
    %v141 = vpop.f32.mrf.mxu0
    %142 = vdwg.mxu0
    %143 = vmatpush.bf16.msra.mxu0 0
    %144 = vmatpush.bf16.msra.mxu0 0
    %145 = vmatpush.bf16.msra.mxu0 0
    %146 = vmatpush.bf16.msra.mxu0 0
    %147 = vmatpush.bf16.msra.mxu0 0
    %148 = vmatpush.bf16.msra.mxu0 0
    %149 = vmatpush.bf16.msra.mxu0 %v112
    %150 = vmatpush.bf16.msra.mxu0 %v90
    %151 = vmatmul.bf16.gmra.mxu0 %v102
    %v152 = vpop.f32.mrf.mxu0
    %v153 = vadd.f32 %v64, %v152
    %v154 = vpop.f32.mrf.mxu0
    %155 = vdwg.mxu0
    %156 = vmatpush.bf16.msra.mxu0 0
    %157 = vmatpush.bf16.msra.mxu0 0
    %158 = vmatpush.bf16.msra.mxu0 0
    %159 = vmatpush.bf16.msra.mxu0 0
    %160 = vmatpush.bf16.msra.mxu0 0
    %161 = vmatpush.bf16.msra.mxu0 0
    %162 = vmatpush.bf16.msra.mxu0 %v115
    %163 = vmatpush.bf16.msra.mxu0 %v91
    %164 = vmatmul.bf16.gmra.mxu0 %v102
    %v165 = vpop.f32.mrf.mxu0
    %v166 = vadd.f32 %v65, %v165
    %v167 = vpop.f32.mrf.mxu0
    %168 = vdwg.mxu0
    %v169 = vmax.f32 %v127, 0.0
    %v170 = vmax.f32 %v140, 0.0
    %v171 = vmax.f32 %v153, 0.0
    %v172 = vmax.f32 %v166, 0.0
    %v173 = vpack.c.bf16 %v169, %v169
    %v174 = vpack.c.bf16 %v170, %v170
    %v175 = vpack.c.bf16 %v171, %v171
    %v176 = vpack.c.bf16 %v172, %v172
    %v177 = vld [vmem:[#allocation4] sm:$0xff]
    %v178 = vld [vmem:[#allocation4 + $0x8] sm:$0xff]
    %v179 = vld [vmem:[#allocation4 + $0x10] sm:$0xff]
    %v180 = vld [vmem:[#allocation4 + $0x18] sm:$0xf]
    %v181 = vld [vmem:[#allocation4 + $0x1c] sm:$0xff]
    %v182 = vld [vmem:[#allocation4 + $0x24] sm:$0xff]
    %v183 = vld [vmem:[#allocation4 + $0x2c] sm:$0xff]
    %v184 = vld [vmem:[#allocation4 + $0x34] sm:$0xf]
    %v185 = vld [vmem:[#allocation4 + $0x38] sm:$0xff]
    %v186 = vld [vmem:[#allocation4 + $0x40] sm:$0xff]
    %v187 = vld [vmem:[#allocation4 + $0x48] sm:$0xff]
    %v188 = vld [vmem:[#allocation4 + $0x50] sm:$0xf]
    %v189 = vld [vmem:[#allocation4 + $0x54] sm:$0xff]
    %v190 = vld [vmem:[#allocation4 + $0x5c] sm:$0xff]
    %v191 = vld [vmem:[#allocation4 + $0x64] sm:$0xff]
    %v192 = vld [vmem:[#allocation4 + $0x6c] sm:$0xf]
    %v193 = vld [vmem:[#allocation4 + $0x70] sm:$0xff]
    %v194 = vld [vmem:[#allocation4 + $0x78] sm:$0xff]
    %v195 = vld [vmem:[#allocation4 + $0x80] sm:$0xff]
    %v196 = vld [vmem:[#allocation4 + $0x88] sm:$0xf]
    %v197 = vld [vmem:[#allocation4 + $0x8c] sm:$0xff]
    %v198 = vld [vmem:[#allocation4 + $0x94] sm:$0xff]
    %v199 = vld [vmem:[#allocation4 + $0x9c] sm:$0xff]
    %v200 = vld [vmem:[#allocation4 + $0xa4] sm:$0xf]
    %v201 = vld [vmem:[#allocation4 + $0xa8] sm:$0xff]
    %v202 = vld [vmem:[#allocation4 + $0xb0] sm:$0xff]
    %v203 = vld [vmem:[#allocation4 + $0xb8] sm:$0xff]
    %v204 = vld [vmem:[#allocation4 + $0xc0] sm:$0xf]
    %v205 = vld [vmem:[#allocation4 + $0xc4] sm:$0xff]
    %v206 = vld [vmem:[#allocation4 + $0xcc] sm:$0xff]
    %v207 = vld [vmem:[#allocation4 + $0xd4] sm:$0xff]
    %v208 = vld [vmem:[#allocation4 + $0xdc] sm:$0xf]
    %v209 = vld [vmem:[#allocation4 + $0xe0] sm:$0xff]
    %v210 = vld [vmem:[#allocation4 + $0xe8] sm:$0xff]
    %v211 = vld [vmem:[#allocation4 + $0xf0] sm:$0xff]
    %v212 = vld [vmem:[#allocation4 + $0xf8] sm:$0xf]
    %v213 = vld [vmem:[#allocation4 + $0xfc] sm:$0xff]
    %v214 = vld [vmem:[#allocation4 + $0x104] sm:$0xff]
    %v215 = vld [vmem:[#allocation4 + $0x10c] sm:$0xff]
    %v216 = vld [vmem:[#allocation4 + $0x114] sm:$0xf]
    %v217 = vld [vmem:[#allocation4 + $0x118] sm:$0xff]
    %v218 = vld [vmem:[#allocation4 + $0x120] sm:$0xff]
    %v219 = vld [vmem:[#allocation4 + $0x128] sm:$0xff]
    %v220 = vld [vmem:[#allocation4 + $0x130] sm:$0xf]
    %v221 = vld [vmem:[#allocation4 + $0x134] sm:$0xff]
    %v222 = vld [vmem:[#allocation4 + $0x13c] sm:$0xff]
    %v223 = vld [vmem:[#allocation4 + $0x144] sm:$0xff]
    %v224 = vld [vmem:[#allocation4 + $0x14c] sm:$0xf]
    %v225 = vld [vmem:[#allocation4 + $0x150] sm:$0xff]
    %v226 = vld [vmem:[#allocation4 + $0x158] sm:$0xff]
    %v227 = vld [vmem:[#allocation4 + $0x160] sm:$0xff]
    %v228 = vld [vmem:[#allocation4 + $0x168] sm:$0xf]
    %v229 = vld [vmem:[#allocation4 + $0x16c] sm:$0xff]
    %v230 = vld [vmem:[#allocation4 + $0x174] sm:$0xff]
    %v231 = vld [vmem:[#allocation4 + $0x17c] sm:$0xff]
    %v232 = vld [vmem:[#allocation4 + $0x184] sm:$0xf]
    %v233 = vld [vmem:[#allocation4 + $0x188] sm:$0xff]
    %v234 = vld [vmem:[#allocation4 + $0x190] sm:$0xff]
    %v235 = vld [vmem:[#allocation4 + $0x198] sm:$0xff]
    %v236 = vld [vmem:[#allocation4 + $0x1a0] sm:$0xf]
    %v237 = vld [vmem:[#allocation4 + $0x1a4] sm:$0xff]
    %v238 = vld [vmem:[#allocation4 + $0x1ac] sm:$0xff]
    %v239 = vld [vmem:[#allocation4 + $0x1b4] sm:$0xff]
    %v240 = vld [vmem:[#allocation4 + $0x1bc] sm:$0xf]
    %v241 = vld [vmem:[#allocation4 + $0x1c0] sm:$0xff]
    %v242 = vld [vmem:[#allocation4 + $0x1c8] sm:$0xff]
    %v243 = vld [vmem:[#allocation4 + $0x1d0] sm:$0xff]
    %v244 = vld [vmem:[#allocation4 + $0x1d8] sm:$0xf]
    %v245 = vld [vmem:[#allocation4 + $0x1dc] sm:$0xff]
    %v246 = vld [vmem:[#allocation4 + $0x1e4] sm:$0xff]
    %v247 = vld [vmem:[#allocation4 + $0x1ec] sm:$0xff]
    %v248 = vld [vmem:[#allocation4 + $0x1f4] sm:$0xf]
    %v249 = vld [vmem:[#allocation4 + $0x1f8] sm:$0xff]
    %v250 = vld [vmem:[#allocation4 + $0x200] sm:$0xff]
    %v251 = vld [vmem:[#allocation4 + $0x208] sm:$0xff]
    %v252 = vld [vmem:[#allocation4 + $0x210] sm:$0xf]
    %v253 = vld [vmem:[#allocation4 + $0x214] sm:$0xff]
    %v254 = vld [vmem:[#allocation4 + $0x21c] sm:$0xff]
    %v255 = vld [vmem:[#allocation4 + $0x224] sm:$0xff]
    %v256 = vld [vmem:[#allocation4 + $0x22c] sm:$0xf]
    %v257 = vld [vmem:[#allocation4 + $0x230] sm:$0xff]
    %v258 = vld [vmem:[#allocation4 + $0x238] sm:$0xff]
    %v259 = vld [vmem:[#allocation4 + $0x240] sm:$0xff]
    %v260 = vld [vmem:[#allocation4 + $0x248] sm:$0xf]
    %v261 = vld [vmem:[#allocation4 + $0x24c] sm:$0xff]
    %v262 = vld [vmem:[#allocation4 + $0x254] sm:$0xff]
    %v263 = vld [vmem:[#allocation4 + $0x25c] sm:$0xff]
    %v264 = vld [vmem:[#allocation4 + $0x264] sm:$0xf]
    %v265 = vld [vmem:[#allocation4 + $0x268] sm:$0xff]
    %v266 = vld [vmem:[#allocation4 + $0x270] sm:$0xff]
    %v267 = vld [vmem:[#allocation4 + $0x278] sm:$0xff]
    %v268 = vld [vmem:[#allocation4 + $0x280] sm:$0xf]
    %v269 = vld [vmem:[#allocation4 + $0x284] sm:$0xff]
    %v270 = vld [vmem:[#allocation4 + $0x28c] sm:$0xff]
    %v271 = vld [vmem:[#allocation4 + $0x294] sm:$0xff]
    %v272 = vld [vmem:[#allocation4 + $0x29c] sm:$0xf]
    %v273 = vld [vmem:[#allocation4 + $0x2a0] sm:$0xff]
    %v274 = vld [vmem:[#allocation4 + $0x2a8] sm:$0xff]
    %v275 = vld [vmem:[#allocation4 + $0x2b0] sm:$0xff]
    %v276 = vld [vmem:[#allocation4 + $0x2b8] sm:$0xf]
    %v277 = vld [vmem:[#allocation4 + $0x2bc] sm:$0xff]
    %v278 = vld [vmem:[#allocation4 + $0x2c4] sm:$0xff]
    %v279 = vld [vmem:[#allocation4 + $0x2cc] sm:$0xff]
    %v280 = vld [vmem:[#allocation4 + $0x2d4] sm:$0xf]
    %v281 = vld [vmem:[#allocation4 + $0x2d8] sm:$0xff]
    %v282 = vld [vmem:[#allocation4 + $0x2e0] sm:$0xff]
    %v283 = vld [vmem:[#allocation4 + $0x2e8] sm:$0xff]
    %v284 = vld [vmem:[#allocation4 + $0x2f0] sm:$0xf]
    %v285 = vld [vmem:[#allocation4 + $0x2f4] sm:$0xff]
    %v286 = vld [vmem:[#allocation4 + $0x2fc] sm:$0xff]
    %v287 = vld [vmem:[#allocation4 + $0x304] sm:$0xff]
    %v288 = vld [vmem:[#allocation4 + $0x30c] sm:$0xf]
    %v289 = vld [vmem:[#allocation4 + $0x310] sm:$0xff]
    %v290 = vld [vmem:[#allocation4 + $0x318] sm:$0xff]
    %v291 = vld [vmem:[#allocation4 + $0x320] sm:$0xff]
    %v292 = vld [vmem:[#allocation4 + $0x328] sm:$0xf]
    %v293 = vld [vmem:[#allocation4 + $0x32c] sm:$0xff]
    %v294 = vld [vmem:[#allocation4 + $0x334] sm:$0xff]
    %v295 = vld [vmem:[#allocation4 + $0x33c] sm:$0xff]
    %v296 = vld [vmem:[#allocation4 + $0x344] sm:$0xf]
    %v297 = vld [vmem:[#allocation4 + $0x348] sm:$0xff]
    %v298 = vld [vmem:[#allocation4 + $0x350] sm:$0xff]
    %v299 = vld [vmem:[#allocation4 + $0x358] sm:$0xff]
    %v300 = vld [vmem:[#allocation4 + $0x360] sm:$0xf]
    %v301 = vld [vmem:[#allocation4 + $0x364] sm:$0xff]
    %v302 = vld [vmem:[#allocation4 + $0x36c] sm:$0xff]
    %v303 = vld [vmem:[#allocation4 + $0x374] sm:$0xff]
    %v304 = vld [vmem:[#allocation4 + $0x37c] sm:$0xf]
    %v305 = vld [vmem:[#allocation4 + $0x380] sm:$0xff]
    %v306 = vld [vmem:[#allocation4 + $0x388] sm:$0xff]
    %v307 = vld [vmem:[#allocation4 + $0x390] sm:$0xff]
    %v308 = vld [vmem:[#allocation4 + $0x398] sm:$0xf]
    %v309 = vld [vmem:[#allocation4 + $0x39c] sm:$0xff]
    %v310 = vld [vmem:[#allocation4 + $0x3a4] sm:$0xff]
    %v311 = vld [vmem:[#allocation4 + $0x3ac] sm:$0xff]
    %v312 = vld [vmem:[#allocation4 + $0x3b4] sm:$0xf]
    %v313 = vld [vmem:[#allocation4 + $0x3b8] sm:$0xff]
    %v314 = vld [vmem:[#allocation4 + $0x3c0] sm:$0xff]
    %v315 = vld [vmem:[#allocation4 + $0x3c8] sm:$0xff]
    %v316 = vld [vmem:[#allocation4 + $0x3d0] sm:$0xf]
    %v317 = vld [vmem:[#allocation4 + $0x3d4] sm:$0xff]
    %v318 = vld [vmem:[#allocation4 + $0x3dc] sm:$0xff]
    %v319 = vld [vmem:[#allocation4 + $0x3e4] sm:$0xff]
    %v320 = vld [vmem:[#allocation4 + $0x3ec] sm:$0xf]
    %v321 = vld [vmem:[#allocation4 + $0x3f0] sm:$0xff]
    %v322 = vld [vmem:[#allocation4 + $0x3f8] sm:$0xff]
    %v323 = vld [vmem:[#allocation4 + $0x400] sm:$0xff]
    %v324 = vld [vmem:[#allocation4 + $0x408] sm:$0xf]
    %v325 = vld [vmem:[#allocation4 + $0x40c] sm:$0xff]
    %v326 = vld [vmem:[#allocation4 + $0x414] sm:$0xff]
    %v327 = vld [vmem:[#allocation4 + $0x41c] sm:$0xff]
    %v328 = vld [vmem:[#allocation4 + $0x424] sm:$0xf]
    %v329 = vld [vmem:[#allocation4 + $0x428] sm:$0xff]
    %v330 = vld [vmem:[#allocation4 + $0x430] sm:$0xff]
    %v331 = vld [vmem:[#allocation4 + $0x438] sm:$0xff]
    %v332 = vld [vmem:[#allocation4 + $0x440] sm:$0xf]
    %v333 = vld [vmem:[#allocation4 + $0x444] sm:$0xff]
    %v334 = vld [vmem:[#allocation4 + $0x44c] sm:$0xff]
    %v335 = vld [vmem:[#allocation4 + $0x454] sm:$0xff]
    %v336 = vld [vmem:[#allocation4 + $0x45c] sm:$0xf]
    %v337 = vld [vmem:[#allocation4 + $0x460] sm:$0xff]
    %v338 = vld [vmem:[#allocation4 + $0x468] sm:$0xff]
    %v339 = vld [vmem:[#allocation4 + $0x470] sm:$0xff]
    %v340 = vld [vmem:[#allocation4 + $0x478] sm:$0xf]
    %v341 = vld [vmem:[#allocation4 + $0x47c] sm:$0xff]
    %v342 = vld [vmem:[#allocation4 + $0x484] sm:$0xff]
    %v343 = vld [vmem:[#allocation4 + $0x48c] sm:$0xff]
    %v344 = vld [vmem:[#allocation4 + $0x494] sm:$0xf]
    %v345 = vld [vmem:[#allocation4 + $0x498] sm:$0xff]
    %v346 = vld [vmem:[#allocation4 + $0x4a0] sm:$0xff]
    %v347 = vld [vmem:[#allocation4 + $0x4a8] sm:$0xff]
    %v348 = vld [vmem:[#allocation4 + $0x4b0] sm:$0xf]
    %v349 = vld [vmem:[#allocation4 + $0x4b4] sm:$0xff]
    %v350 = vld [vmem:[#allocation4 + $0x4bc] sm:$0xff]
    %v351 = vld [vmem:[#allocation4 + $0x4c4] sm:$0xff]
    %v352 = vld [vmem:[#allocation4 + $0x4cc] sm:$0xf]
    %v353 = vld [vmem:[#allocation4 + $0x4d0] sm:$0xff]
    %v354 = vld [vmem:[#allocation4 + $0x4d8] sm:$0xff]
    %v355 = vld [vmem:[#allocation4 + $0x4e0] sm:$0xff]
    %v356 = vld [vmem:[#allocation4 + $0x4e8] sm:$0xf]
    %v357 = vld [vmem:[#allocation4 + $0x4ec] sm:$0xff]
    %v358 = vld [vmem:[#allocation4 + $0x4f4] sm:$0xff]
    %v359 = vld [vmem:[#allocation4 + $0x4fc] sm:$0xff]
    %v360 = vld [vmem:[#allocation4 + $0x504] sm:$0xf]
    %v361 = vld [vmem:[#allocation4 + $0x508] sm:$0xff]
    %v362 = vld [vmem:[#allocation4 + $0x510] sm:$0xff]
    %v363 = vld [vmem:[#allocation4 + $0x518] sm:$0xff]
    %v364 = vld [vmem:[#allocation4 + $0x520] sm:$0xf]
    %v365 = vld [vmem:[#allocation4 + $0x524] sm:$0xff]
    %v366 = vld [vmem:[#allocation4 + $0x52c] sm:$0xff]
    %v367 = vld [vmem:[#allocation4 + $0x534] sm:$0xff]
    %v368 = vld [vmem:[#allocation4 + $0x53c] sm:$0xf]
    %v369 = vld [vmem:[#allocation4 + $0x540] sm:$0xff]
    %v370 = vld [vmem:[#allocation4 + $0x548] sm:$0xff]
    %v371 = vld [vmem:[#allocation4 + $0x550] sm:$0xff]
    %v372 = vld [vmem:[#allocation4 + $0x558] sm:$0xf]
    %v373 = vld [vmem:[#allocation4 + $0x55c] sm:$0xff]
    %v374 = vld [vmem:[#allocation4 + $0x564] sm:$0xff]
    %v375 = vld [vmem:[#allocation4 + $0x56c] sm:$0xff]
    %v376 = vld [vmem:[#allocation4 + $0x574] sm:$0xf]
    %v377 = vld [vmem:[%s4] sm:$0x7f]
    %v379 = vperm.slane %v377, 0
    %v380 = vperm.slane %v377, 1
    %v381 = vperm.slane %v377, 2
    %v382 = vperm.slane %v377, 3
    %v383 = vperm.slane %v377, 4
    %v384 = vperm.slane %v377, 5
    %v385 = vperm.slane %v377, 6
    %v593 = vunpack.c.l.b16 %v177
    %v594 = vunpack.c.h.b16 %v177
    %v595 = vunpack.c.l.b16 %v178
    %v596 = vunpack.c.h.b16 %v178
    %v597 = vunpack.c.l.b16 %v179
    %v598 = vunpack.c.h.b16 %v179
    %v599 = vunpack.c.l.b16 %v180
    %v600 = vunpack.c.l.b16 %v181
    %v601 = vunpack.c.h.b16 %v181
    %v602 = vunpack.c.l.b16 %v182
    %v603 = vunpack.c.h.b16 %v182
    %v604 = vunpack.c.l.b16 %v183
    %v605 = vunpack.c.h.b16 %v183
    %v606 = vunpack.c.l.b16 %v184
    %v607 = vunpack.c.l.b16 %v185
    %v608 = vunpack.c.h.b16 %v185
    %v609 = vunpack.c.l.b16 %v186
    %v610 = vunpack.c.h.b16 %v186
    %v611 = vunpack.c.l.b16 %v187
    %v612 = vunpack.c.h.b16 %v187
    %v613 = vunpack.c.l.b16 %v188
    %v614 = vunpack.c.l.b16 %v189
    %v615 = vunpack.c.h.b16 %v189
    %v616 = vunpack.c.l.b16 %v190
    %v617 = vunpack.c.h.b16 %v190
    %v618 = vunpack.c.l.b16 %v191
    %v619 = vunpack.c.h.b16 %v191
    %v620 = vunpack.c.l.b16 %v192
    %v621 = vunpack.c.l.b16 %v193
    %v622 = vunpack.c.h.b16 %v193
    %v623 = vunpack.c.l.b16 %v194
    %v624 = vunpack.c.h.b16 %v194
    %v625 = vunpack.c.l.b16 %v195
    %v626 = vunpack.c.h.b16 %v195
    %v627 = vunpack.c.l.b16 %v196
    %v628 = vunpack.c.l.b16 %v197
    %v629 = vunpack.c.h.b16 %v197
    %v630 = vunpack.c.l.b16 %v198
    %v631 = vunpack.c.h.b16 %v198
    %v632 = vunpack.c.l.b16 %v199
    %v633 = vunpack.c.h.b16 %v199
    %v634 = vunpack.c.l.b16 %v200
    %v635 = vunpack.c.l.b16 %v201
    %v636 = vunpack.c.h.b16 %v201
    %v637 = vunpack.c.l.b16 %v202
    %v638 = vunpack.c.h.b16 %v202
    %v639 = vunpack.c.l.b16 %v203
    %v640 = vunpack.c.h.b16 %v203
    %v641 = vunpack.c.l.b16 %v204
    %v642 = vunpack.c.l.b16 %v205
    %v643 = vunpack.c.h.b16 %v205
    %v644 = vunpack.c.l.b16 %v206
    %v645 = vunpack.c.h.b16 %v206
    %v646 = vunpack.c.l.b16 %v207
    %v647 = vunpack.c.h.b16 %v207
    %v648 = vunpack.c.l.b16 %v208
    %v649 = vunpack.c.l.b16 %v209
    %v650 = vunpack.c.h.b16 %v209
    %v651 = vunpack.c.l.b16 %v210
    %v652 = vunpack.c.h.b16 %v210
    %v653 = vunpack.c.l.b16 %v211
    %v654 = vunpack.c.h.b16 %v211
    %v655 = vunpack.c.l.b16 %v212
    %v656 = vunpack.c.l.b16 %v213
    %v657 = vunpack.c.h.b16 %v213
    %v658 = vunpack.c.l.b16 %v214
    %v659 = vunpack.c.h.b16 %v214
    %v660 = vunpack.c.l.b16 %v215
    %v661 = vunpack.c.h.b16 %v215
    %v662 = vunpack.c.l.b16 %v216
    %v663 = vunpack.c.l.b16 %v217
    %v664 = vunpack.c.h.b16 %v217
    %v665 = vunpack.c.l.b16 %v218
    %v666 = vunpack.c.h.b16 %v218
    %v667 = vunpack.c.l.b16 %v219
    %v668 = vunpack.c.h.b16 %v219
    %v669 = vunpack.c.l.b16 %v220
    %v670 = vunpack.c.l.b16 %v221
    %v671 = vunpack.c.h.b16 %v221
    %v672 = vunpack.c.l.b16 %v222
    %v673 = vunpack.c.h.b16 %v222
    %v674 = vunpack.c.l.b16 %v223
    %v675 = vunpack.c.h.b16 %v223
    %v676 = vunpack.c.l.b16 %v224
    %v677 = vunpack.c.l.b16 %v225
    %v678 = vunpack.c.h.b16 %v225
    %v679 = vunpack.c.l.b16 %v226
    %v680 = vunpack.c.h.b16 %v226
    %v681 = vunpack.c.l.b16 %v227
    %v682 = vunpack.c.h.b16 %v227
    %v683 = vunpack.c.l.b16 %v228
    %v684 = vunpack.c.l.b16 %v229
    %v685 = vunpack.c.h.b16 %v229
    %v686 = vunpack.c.l.b16 %v230
    %v687 = vunpack.c.h.b16 %v230
    %v688 = vunpack.c.l.b16 %v231
    %v689 = vunpack.c.h.b16 %v231
    %v690 = vunpack.c.l.b16 %v232
    %v691 = vunpack.c.l.b16 %v233
    %v692 = vunpack.c.h.b16 %v233
    %v693 = vunpack.c.l.b16 %v234
    %v694 = vunpack.c.h.b16 %v234
    %v695 = vunpack.c.l.b16 %v235
    %v696 = vunpack.c.h.b16 %v235
    %v697 = vunpack.c.l.b16 %v236
    %v698 = vunpack.c.l.b16 %v237
    %v699 = vunpack.c.h.b16 %v237
    %v700 = vunpack.c.l.b16 %v238
    %v701 = vunpack.c.h.b16 %v238
    %v702 = vunpack.c.l.b16 %v239
    %v703 = vunpack.c.h.b16 %v239
    %v704 = vunpack.c.l.b16 %v240
    %v705 = vunpack.c.l.b16 %v241
    %v706 = vunpack.c.h.b16 %v241
    %v707 = vunpack.c.l.b16 %v242
    %v708 = vunpack.c.h.b16 %v242
    %v709 = vunpack.c.l.b16 %v243
    %v710 = vunpack.c.h.b16 %v243
    %v711 = vunpack.c.l.b16 %v244
    %v712 = vunpack.c.l.b16 %v245
    %v713 = vunpack.c.h.b16 %v245
    %v714 = vunpack.c.l.b16 %v246
    %v715 = vunpack.c.h.b16 %v246
    %v716 = vunpack.c.l.b16 %v247
    %v717 = vunpack.c.h.b16 %v247
    %v718 = vunpack.c.l.b16 %v248
    %v719 = vunpack.c.l.b16 %v249
    %v720 = vunpack.c.h.b16 %v249
    %v721 = vunpack.c.l.b16 %v250
    %v722 = vunpack.c.h.b16 %v250
    %v723 = vunpack.c.l.b16 %v251
    %v724 = vunpack.c.h.b16 %v251
    %v725 = vunpack.c.l.b16 %v252
    %v726 = vunpack.c.l.b16 %v253
    %v727 = vunpack.c.h.b16 %v253
    %v728 = vunpack.c.l.b16 %v254
    %v729 = vunpack.c.h.b16 %v254
    %v730 = vunpack.c.l.b16 %v255
    %v731 = vunpack.c.h.b16 %v255
    %v732 = vunpack.c.l.b16 %v256
    %v733 = vunpack.c.l.b16 %v257
    %v734 = vunpack.c.h.b16 %v257
    %v735 = vunpack.c.l.b16 %v258
    %v736 = vunpack.c.h.b16 %v258
    %v737 = vunpack.c.l.b16 %v259
    %v738 = vunpack.c.h.b16 %v259
    %v739 = vunpack.c.l.b16 %v260
    %v740 = vunpack.c.l.b16 %v261
    %v741 = vunpack.c.h.b16 %v261
    %v742 = vunpack.c.l.b16 %v262
    %v743 = vunpack.c.h.b16 %v262
    %v744 = vunpack.c.l.b16 %v263
    %v745 = vunpack.c.h.b16 %v263
    %v746 = vunpack.c.l.b16 %v264
    %v747 = vunpack.c.l.b16 %v265
    %v748 = vunpack.c.h.b16 %v265
    %v749 = vunpack.c.l.b16 %v266
    %v750 = vunpack.c.h.b16 %v266
    %v751 = vunpack.c.l.b16 %v267
    %v752 = vunpack.c.h.b16 %v267
    %v753 = vunpack.c.l.b16 %v268
    %v754 = vunpack.c.l.b16 %v269
    %v755 = vunpack.c.h.b16 %v269
    %v756 = vunpack.c.l.b16 %v270
    %v757 = vunpack.c.h.b16 %v270
    %v758 = vunpack.c.l.b16 %v271
    %v759 = vunpack.c.h.b16 %v271
    %v760 = vunpack.c.l.b16 %v272
    %v761 = vunpack.c.l.b16 %v273
    %v762 = vunpack.c.h.b16 %v273
    %v763 = vunpack.c.l.b16 %v274
    %v764 = vunpack.c.h.b16 %v274
    %v765 = vunpack.c.l.b16 %v275
    %v766 = vunpack.c.h.b16 %v275
    %v767 = vunpack.c.l.b16 %v276
    %v768 = vunpack.c.l.b16 %v277
    %v769 = vunpack.c.h.b16 %v277
    %v770 = vunpack.c.l.b16 %v278
    %v771 = vunpack.c.h.b16 %v278
    %v772 = vunpack.c.l.b16 %v279
    %v773 = vunpack.c.h.b16 %v279
    %v774 = vunpack.c.l.b16 %v280
    %v775 = vunpack.c.l.b16 %v281
    %v776 = vunpack.c.h.b16 %v281
    %v777 = vunpack.c.l.b16 %v282
    %v778 = vunpack.c.h.b16 %v282
    %v779 = vunpack.c.l.b16 %v283
    %v780 = vunpack.c.h.b16 %v283
    %v781 = vunpack.c.l.b16 %v284
    %v782 = vunpack.c.l.b16 %v285
    %v783 = vunpack.c.h.b16 %v285
    %v784 = vunpack.c.l.b16 %v286
    %v785 = vunpack.c.h.b16 %v286
    %v786 = vunpack.c.l.b16 %v287
    %v787 = vunpack.c.h.b16 %v287
    %v788 = vunpack.c.l.b16 %v288
    %v789 = vunpack.c.l.b16 %v289
    %v790 = vunpack.c.h.b16 %v289
    %v791 = vunpack.c.l.b16 %v290
    %v792 = vunpack.c.h.b16 %v290
    %v793 = vunpack.c.l.b16 %v291
    %v794 = vunpack.c.h.b16 %v291
    %v795 = vunpack.c.l.b16 %v292
    %v796 = vunpack.c.l.b16 %v293
    %v797 = vunpack.c.h.b16 %v293
    %v798 = vunpack.c.l.b16 %v294
    %v799 = vunpack.c.h.b16 %v294
    %v800 = vunpack.c.l.b16 %v295
    %v801 = vunpack.c.h.b16 %v295
    %v802 = vunpack.c.l.b16 %v296
    %v803 = vunpack.c.l.b16 %v297
    %v804 = vunpack.c.h.b16 %v297
    %v805 = vunpack.c.l.b16 %v298
    %v806 = vunpack.c.h.b16 %v298
    %v807 = vunpack.c.l.b16 %v299
    %v808 = vunpack.c.h.b16 %v299
    %v809 = vunpack.c.l.b16 %v300
    %v810 = vunpack.c.l.b16 %v301
    %v811 = vunpack.c.h.b16 %v301
    %v812 = vunpack.c.l.b16 %v302
    %v813 = vunpack.c.h.b16 %v302
    %v814 = vunpack.c.l.b16 %v303
    %v815 = vunpack.c.h.b16 %v303
    %v816 = vunpack.c.l.b16 %v304
    %v817 = vunpack.c.l.b16 %v305
    %v818 = vunpack.c.h.b16 %v305
    %v819 = vunpack.c.l.b16 %v306
    %v820 = vunpack.c.h.b16 %v306
    %v821 = vunpack.c.l.b16 %v307
    %v822 = vunpack.c.h.b16 %v307
    %v823 = vunpack.c.l.b16 %v308
    %v824 = vunpack.c.l.b16 %v309
    %v825 = vunpack.c.h.b16 %v309
    %v826 = vunpack.c.l.b16 %v310
    %v827 = vunpack.c.h.b16 %v310
    %v828 = vunpack.c.l.b16 %v311
    %v829 = vunpack.c.h.b16 %v311
    %v830 = vunpack.c.l.b16 %v312
    %v831 = vunpack.c.l.b16 %v313
    %v832 = vunpack.c.h.b16 %v313
    %v833 = vunpack.c.l.b16 %v314
    %v834 = vunpack.c.h.b16 %v314
    %v835 = vunpack.c.l.b16 %v315
    %v836 = vunpack.c.h.b16 %v315
    %v837 = vunpack.c.l.b16 %v316
    %v838 = vunpack.c.l.b16 %v317
    %v839 = vunpack.c.h.b16 %v317
    %v840 = vunpack.c.l.b16 %v318
    %v841 = vunpack.c.h.b16 %v318
    %v842 = vunpack.c.l.b16 %v319
    %v843 = vunpack.c.h.b16 %v319
    %v844 = vunpack.c.l.b16 %v320
    %v845 = vunpack.c.l.b16 %v321
    %v846 = vunpack.c.h.b16 %v321
    %v847 = vunpack.c.l.b16 %v322
    %v848 = vunpack.c.h.b16 %v322
    %v849 = vunpack.c.l.b16 %v323
    %v850 = vunpack.c.h.b16 %v323
    %v851 = vunpack.c.l.b16 %v324
    %v852 = vunpack.c.l.b16 %v325
    %v853 = vunpack.c.h.b16 %v325
    %v854 = vunpack.c.l.b16 %v326
    %v855 = vunpack.c.h.b16 %v326
    %v856 = vunpack.c.l.b16 %v327
    %v857 = vunpack.c.h.b16 %v327
    %v858 = vunpack.c.l.b16 %v328
    %v859 = vunpack.c.l.b16 %v329
    %v860 = vunpack.c.h.b16 %v329
    %v861 = vunpack.c.l.b16 %v330
    %v862 = vunpack.c.h.b16 %v330
    %v863 = vunpack.c.l.b16 %v331
    %v864 = vunpack.c.h.b16 %v331
    %v865 = vunpack.c.l.b16 %v332
    %v866 = vunpack.c.l.b16 %v333
    %v867 = vunpack.c.h.b16 %v333
    %v868 = vunpack.c.l.b16 %v334
    %v869 = vunpack.c.h.b16 %v334
    %v870 = vunpack.c.l.b16 %v335
    %v871 = vunpack.c.h.b16 %v335
    %v872 = vunpack.c.l.b16 %v336
    %v873 = vunpack.c.l.b16 %v337
    %v874 = vunpack.c.h.b16 %v337
    %v875 = vunpack.c.l.b16 %v338
    %v876 = vunpack.c.h.b16 %v338
    %v877 = vunpack.c.l.b16 %v339
    %v878 = vunpack.c.h.b16 %v339
    %v879 = vunpack.c.l.b16 %v340
    %v880 = vunpack.c.l.b16 %v341
    %v881 = vunpack.c.h.b16 %v341
    %v882 = vunpack.c.l.b16 %v342
    %v883 = vunpack.c.h.b16 %v342
    %v884 = vunpack.c.l.b16 %v343
    %v885 = vunpack.c.h.b16 %v343
    %v886 = vunpack.c.l.b16 %v344
    %v887 = vunpack.c.l.b16 %v345
    %v888 = vunpack.c.h.b16 %v345
    %v889 = vunpack.c.l.b16 %v346
    %v890 = vunpack.c.h.b16 %v346
    %v891 = vunpack.c.l.b16 %v347
    %v892 = vunpack.c.h.b16 %v347
    %v893 = vunpack.c.l.b16 %v348
    %v894 = vunpack.c.l.b16 %v349
    %v895 = vunpack.c.h.b16 %v349
    %v896 = vunpack.c.l.b16 %v350
    %v897 = vunpack.c.h.b16 %v350
    %v898 = vunpack.c.l.b16 %v351
    %v899 = vunpack.c.h.b16 %v351
    %v900 = vunpack.c.l.b16 %v352
    %v901 = vunpack.c.l.b16 %v353
    %v902 = vunpack.c.h.b16 %v353
    %v903 = vunpack.c.l.b16 %v354
    %v904 = vunpack.c.h.b16 %v354
    %v905 = vunpack.c.l.b16 %v355
    %v906 = vunpack.c.h.b16 %v355
    %v907 = vunpack.c.l.b16 %v356
    %v908 = vunpack.c.l.b16 %v357
    %v909 = vunpack.c.h.b16 %v357
    %v910 = vunpack.c.l.b16 %v358
    %v911 = vunpack.c.h.b16 %v358
    %v912 = vunpack.c.l.b16 %v359
    %v913 = vunpack.c.h.b16 %v359
    %v914 = vunpack.c.l.b16 %v360
    %v915 = vunpack.c.l.b16 %v361
    %v916 = vunpack.c.h.b16 %v361
    %v917 = vunpack.c.l.b16 %v362
    %v918 = vunpack.c.h.b16 %v362
    %v919 = vunpack.c.l.b16 %v363
    %v920 = vunpack.c.h.b16 %v363
    %v921 = vunpack.c.l.b16 %v364
    %v922 = vunpack.c.l.b16 %v365
    %v923 = vunpack.c.h.b16 %v365
    %v924 = vunpack.c.l.b16 %v366
    %v925 = vunpack.c.h.b16 %v366
    %v926 = vunpack.c.l.b16 %v367
    %v927 = vunpack.c.h.b16 %v367
    %v928 = vunpack.c.l.b16 %v368
    %v929 = vunpack.c.l.b16 %v369
    %v930 = vunpack.c.h.b16 %v369
    %v931 = vunpack.c.l.b16 %v370
    %v932 = vunpack.c.h.b16 %v370
    %v933 = vunpack.c.l.b16 %v371
    %v934 = vunpack.c.h.b16 %v371
    %v935 = vunpack.c.l.b16 %v372
    %v936 = vunpack.c.l.b16 %v373
    %v937 = vunpack.c.h.b16 %v373
    %v938 = vunpack.c.l.b16 %v374
    %v939 = vunpack.c.h.b16 %v374
    %v940 = vunpack.c.l.b16 %v375
    %v941 = vunpack.c.h.b16 %v375
    %v942 = vunpack.c.l.b16 %v376
    %v943 = vpack.c.b16 %v600, %v593
    %v944 = vpack.c.b16 %v601, %v594
    %v945 = vpack.c.b16 %v602, %v595
    %v946 = vpack.c.b16 %v603, %v596
    %v947 = vpack.c.b16 %v604, %v597
    %v948 = vpack.c.b16 %v605, %v598
    %v949 = vpack.c.b16 %v606, %v599
    %v950 = vpack.c.b16 %v614, %v607
    %v951 = vpack.c.b16 %v615, %v608
    %v952 = vpack.c.b16 %v616, %v609
    %v953 = vpack.c.b16 %v617, %v610
    %v954 = vpack.c.b16 %v618, %v611
    %v955 = vpack.c.b16 %v619, %v612
    %v956 = vpack.c.b16 %v620, %v613
    %v957 = vpack.c.b16 %v628, %v621
    %v958 = vpack.c.b16 %v629, %v622
    %v959 = vpack.c.b16 %v630, %v623
    %v960 = vpack.c.b16 %v631, %v624
    %v961 = vpack.c.b16 %v632, %v625
    %v962 = vpack.c.b16 %v633, %v626
    %v963 = vpack.c.b16 %v634, %v627
    %v964 = vpack.c.b16 %v642, %v635
    %v965 = vpack.c.b16 %v643, %v636
    %v966 = vpack.c.b16 %v644, %v637
    %v967 = vpack.c.b16 %v645, %v638
    %v968 = vpack.c.b16 %v646, %v639
    %v969 = vpack.c.b16 %v647, %v640
    %v970 = vpack.c.b16 %v648, %v641
    %v971 = vpack.c.b16 %v656, %v649
    %v972 = vpack.c.b16 %v657, %v650
    %v973 = vpack.c.b16 %v658, %v651
    %v974 = vpack.c.b16 %v659, %v652
    %v975 = vpack.c.b16 %v660, %v653
    %v976 = vpack.c.b16 %v661, %v654
    %v977 = vpack.c.b16 %v662, %v655
    %v978 = vpack.c.b16 %v670, %v663
    %v979 = vpack.c.b16 %v671, %v664
    %v980 = vpack.c.b16 %v672, %v665
    %v981 = vpack.c.b16 %v673, %v666
    %v982 = vpack.c.b16 %v674, %v667
    %v983 = vpack.c.b16 %v675, %v668
    %v984 = vpack.c.b16 %v676, %v669
    %v985 = vpack.c.b16 %v684, %v677
    %v986 = vpack.c.b16 %v685, %v678
    %v987 = vpack.c.b16 %v686, %v679
    %v988 = vpack.c.b16 %v687, %v680
    %v989 = vpack.c.b16 %v688, %v681
    %v990 = vpack.c.b16 %v689, %v682
    %v991 = vpack.c.b16 %v690, %v683
    %v992 = vpack.c.b16 %v698, %v691
    %v993 = vpack.c.b16 %v699, %v692
    %v994 = vpack.c.b16 %v700, %v693
    %v995 = vpack.c.b16 %v701, %v694
    %v996 = vpack.c.b16 %v702, %v695
    %v997 = vpack.c.b16 %v703, %v696
    %v998 = vpack.c.b16 %v704, %v697
    %v999 = vpack.c.b16 %v712, %v705
    %v1000 = vpack.c.b16 %v713, %v706
    %v1001 = vpack.c.b16 %v714, %v707
    %v1002 = vpack.c.b16 %v715, %v708
    %v1003 = vpack.c.b16 %v716, %v709
    %v1004 = vpack.c.b16 %v717, %v710
    %v1005 = vpack.c.b16 %v718, %v711
    %v1006 = vpack.c.b16 %v726, %v719
    %v1007 = vpack.c.b16 %v727, %v720
    %v1008 = vpack.c.b16 %v728, %v721
    %v1009 = vpack.c.b16 %v729, %v722
    %v1010 = vpack.c.b16 %v730, %v723
    %v1011 = vpack.c.b16 %v731, %v724
    %v1012 = vpack.c.b16 %v732, %v725
    %v1013 = vpack.c.b16 %v740, %v733
    %v1014 = vpack.c.b16 %v741, %v734
    %v1015 = vpack.c.b16 %v742, %v735
    %v1016 = vpack.c.b16 %v743, %v736
    %v1017 = vpack.c.b16 %v744, %v737
    %v1018 = vpack.c.b16 %v745, %v738
    %v1019 = vpack.c.b16 %v746, %v739
    %v1020 = vpack.c.b16 %v754, %v747
    %v1021 = vpack.c.b16 %v755, %v748
    %v1022 = vpack.c.b16 %v756, %v749
    %v1023 = vpack.c.b16 %v757, %v750
    %v1024 = vpack.c.b16 %v758, %v751
    %v1025 = vpack.c.b16 %v759, %v752
    %v1026 = vpack.c.b16 %v760, %v753
    %v1027 = vpack.c.b16 %v768, %v761
    %v1028 = vpack.c.b16 %v769, %v762
    %v1029 = vpack.c.b16 %v770, %v763
    %v1030 = vpack.c.b16 %v771, %v764
    %v1031 = vpack.c.b16 %v772, %v765
    %v1032 = vpack.c.b16 %v773, %v766
    %v1033 = vpack.c.b16 %v774, %v767
    %v1034 = vpack.c.b16 %v782, %v775
    %v1035 = vpack.c.b16 %v783, %v776
    %v1036 = vpack.c.b16 %v784, %v777
    %v1037 = vpack.c.b16 %v785, %v778
    %v1038 = vpack.c.b16 %v786, %v779
    %v1039 = vpack.c.b16 %v787, %v780
    %v1040 = vpack.c.b16 %v788, %v781
    %v1041 = vpack.c.b16 %v796, %v789
    %v1042 = vpack.c.b16 %v797, %v790
    %v1043 = vpack.c.b16 %v798, %v791
    %v1044 = vpack.c.b16 %v799, %v792
    %v1045 = vpack.c.b16 %v800, %v793
    %v1046 = vpack.c.b16 %v801, %v794
    %v1047 = vpack.c.b16 %v802, %v795
    %v1048 = vpack.c.b16 %v810, %v803
    %v1049 = vpack.c.b16 %v811, %v804
    %v1050 = vpack.c.b16 %v812, %v805
    %v1051 = vpack.c.b16 %v813, %v806
    %v1052 = vpack.c.b16 %v814, %v807
    %v1053 = vpack.c.b16 %v815, %v808
    %v1054 = vpack.c.b16 %v816, %v809
    %v1055 = vpack.c.b16 %v824, %v817
    %v1056 = vpack.c.b16 %v825, %v818
    %v1057 = vpack.c.b16 %v826, %v819
    %v1058 = vpack.c.b16 %v827, %v820
    %v1059 = vpack.c.b16 %v828, %v821
    %v1060 = vpack.c.b16 %v829, %v822
    %v1061 = vpack.c.b16 %v830, %v823
    %v1062 = vpack.c.b16 %v838, %v831
    %v1063 = vpack.c.b16 %v839, %v832
    %v1064 = vpack.c.b16 %v840, %v833
    %v1065 = vpack.c.b16 %v841, %v834
    %v1066 = vpack.c.b16 %v842, %v835
    %v1067 = vpack.c.b16 %v843, %v836
    %v1068 = vpack.c.b16 %v844, %v837
    %v1069 = vpack.c.b16 %v852, %v845
    %v1070 = vpack.c.b16 %v853, %v846
    %v1071 = vpack.c.b16 %v854, %v847
    %v1072 = vpack.c.b16 %v855, %v848
    %v1073 = vpack.c.b16 %v856, %v849
    %v1074 = vpack.c.b16 %v857, %v850
    %v1075 = vpack.c.b16 %v858, %v851
    %v1076 = vpack.c.b16 %v866, %v859
    %v1077 = vpack.c.b16 %v867, %v860
    %v1078 = vpack.c.b16 %v868, %v861
    %v1079 = vpack.c.b16 %v869, %v862
    %v1080 = vpack.c.b16 %v870, %v863
    %v1081 = vpack.c.b16 %v871, %v864
    %v1082 = vpack.c.b16 %v872, %v865
    %v1083 = vpack.c.b16 %v880, %v873
    %v1084 = vpack.c.b16 %v881, %v874
    %v1085 = vpack.c.b16 %v882, %v875
    %v1086 = vpack.c.b16 %v883, %v876
    %v1087 = vpack.c.b16 %v884, %v877
    %v1088 = vpack.c.b16 %v885, %v878
    %v1089 = vpack.c.b16 %v886, %v879
    %v1090 = vpack.c.b16 %v894, %v887
    %v1091 = vpack.c.b16 %v895, %v888
    %v1092 = vpack.c.b16 %v896, %v889
    %v1093 = vpack.c.b16 %v897, %v890
    %v1094 = vpack.c.b16 %v898, %v891
    %v1095 = vpack.c.b16 %v899, %v892
    %v1096 = vpack.c.b16 %v900, %v893
    %v1097 = vpack.c.b16 %v908, %v901
    %v1098 = vpack.c.b16 %v909, %v902
    %v1099 = vpack.c.b16 %v910, %v903
    %v1100 = vpack.c.b16 %v911, %v904
    %v1101 = vpack.c.b16 %v912, %v905
    %v1102 = vpack.c.b16 %v913, %v906
    %v1103 = vpack.c.b16 %v914, %v907
    %v1104 = vpack.c.b16 %v922, %v915
    %v1105 = vpack.c.b16 %v923, %v916
    %v1106 = vpack.c.b16 %v924, %v917
    %v1107 = vpack.c.b16 %v925, %v918
    %v1108 = vpack.c.b16 %v926, %v919
    %v1109 = vpack.c.b16 %v927, %v920
    %v1110 = vpack.c.b16 %v928, %v921
    %v1111 = vpack.c.b16 %v936, %v929
    %v1112 = vpack.c.b16 %v937, %v930
    %v1113 = vpack.c.b16 %v938, %v931
    %v1114 = vpack.c.b16 %v939, %v932
    %v1115 = vpack.c.b16 %v940, %v933
    %v1116 = vpack.c.b16 %v941, %v934
    %v1117 = vpack.c.b16 %v942, %v935
    %vm1293 = vcmask 130048
    %v1295 = vsel %vm1293, %v176, 0
    %1297 = vmatpush.bf16.msra.mxu0 %v992
    %1298 = vmatpush.bf16.msra.mxu0 %v985
    %1299 = vmatpush.bf16.msra.mxu0 %v978
    %1300 = vmatpush.bf16.msra.mxu0 %v971
    %1301 = vmatpush.bf16.msra.mxu0 %v964
    %1302 = vmatpush.bf16.msra.mxu0 %v957
    %1303 = vmatpush.bf16.msra.mxu0 %v950
    %1304 = vmatpush.bf16.msra.mxu0 %v943
    %1305 = vmatmul.bf16.gmra.mxu0 %v173
    %v1306 = vpop.f32.mrf.mxu0
    %v1307 = vadd.f32 %v379, %v1306
    %v1308 = vpop.f32.mrf.mxu0
    %1309 = vdwg.mxu0
    %1310 = vmatpush.bf16.msra.mxu0 %v1048
    %1311 = vmatpush.bf16.msra.mxu0 %v1041
    %1312 = vmatpush.bf16.msra.mxu0 %v1034
    %1313 = vmatpush.bf16.msra.mxu0 %v1027
    %1314 = vmatpush.bf16.msra.mxu0 %v1020
    %1315 = vmatpush.bf16.msra.mxu0 %v1013
    %1316 = vmatpush.bf16.msra.mxu0 %v1006
    %1317 = vmatpush.bf16.msra.mxu0 %v999
    %1318 = vmatmul.bf16.gmra.mxu0 %v174
    %v1319 = vpop.f32.mrf.mxu0
    %v1320 = vadd.f32 %v1307, %v1319
    %v1321 = vpop.f32.mrf.mxu0
    %1322 = vdwg.mxu0
    %1323 = vmatpush.bf16.msra.mxu0 %v1104
    %1324 = vmatpush.bf16.msra.mxu0 %v1097
    %1325 = vmatpush.bf16.msra.mxu0 %v1090
    %1326 = vmatpush.bf16.msra.mxu0 %v1083
    %1327 = vmatpush.bf16.msra.mxu0 %v1076
    %1328 = vmatpush.bf16.msra.mxu0 %v1069
    %1329 = vmatpush.bf16.msra.mxu0 %v1062
    %1330 = vmatpush.bf16.msra.mxu0 %v1055
    %1331 = vmatmul.bf16.gmra.mxu0 %v175
    %v1332 = vpop.f32.mrf.mxu0
    %v1333 = vadd.f32 %v1320, %v1332
    %v1334 = vpop.f32.mrf.mxu0
    %1335 = vdwg.mxu0
    %1336 = vmatpush.bf16.msra.mxu0 0
    %1337 = vmatpush.bf16.msra.mxu0 0
    %1338 = vmatpush.bf16.msra.mxu0 0
    %1339 = vmatpush.bf16.msra.mxu0 0
    %1340 = vmatpush.bf16.msra.mxu0 0
    %1341 = vmatpush.bf16.msra.mxu0 0
    %1342 = vmatpush.bf16.msra.mxu0 0
    %1343 = vmatpush.bf16.msra.mxu0 %v1111
    %1344 = vmatmul.bf16.gmra.mxu0 %v1295
    %v1345 = vpop.f32.mrf.mxu0
    %v1346 = vadd.f32 %v1333, %v1345
    %v1347 = vpop.f32.mrf.mxu0
    %1348 = vdwg.mxu0
    %1349 = vmatpush.bf16.msra.mxu0 %v993
    %1350 = vmatpush.bf16.msra.mxu0 %v986
    %1351 = vmatpush.bf16.msra.mxu0 %v979
    %1352 = vmatpush.bf16.msra.mxu0 %v972
    %1353 = vmatpush.bf16.msra.mxu0 %v965
    %1354 = vmatpush.bf16.msra.mxu0 %v958
    %1355 = vmatpush.bf16.msra.mxu0 %v951
    %1356 = vmatpush.bf16.msra.mxu0 %v944
    %1357 = vmatmul.bf16.gmra.mxu0 %v173
    %v1358 = vpop.f32.mrf.mxu0
    %v1359 = vadd.f32 %v380, %v1358
    %v1360 = vpop.f32.mrf.mxu0
    %1361 = vdwg.mxu0
    %1362 = vmatpush.bf16.msra.mxu0 %v1049
    %1363 = vmatpush.bf16.msra.mxu0 %v1042
    %1364 = vmatpush.bf16.msra.mxu0 %v1035
    %1365 = vmatpush.bf16.msra.mxu0 %v1028
    %1366 = vmatpush.bf16.msra.mxu0 %v1021
    %1367 = vmatpush.bf16.msra.mxu0 %v1014
    %1368 = vmatpush.bf16.msra.mxu0 %v1007
    %1369 = vmatpush.bf16.msra.mxu0 %v1000
    %1370 = vmatmul.bf16.gmra.mxu0 %v174
    %v1371 = vpop.f32.mrf.mxu0
    %v1372 = vadd.f32 %v1359, %v1371
    %v1373 = vpop.f32.mrf.mxu0
    %1374 = vdwg.mxu0
    %1375 = vmatpush.bf16.msra.mxu0 %v1105
    %1376 = vmatpush.bf16.msra.mxu0 %v1098
    %1377 = vmatpush.bf16.msra.mxu0 %v1091
    %1378 = vmatpush.bf16.msra.mxu0 %v1084
    %1379 = vmatpush.bf16.msra.mxu0 %v1077
    %1380 = vmatpush.bf16.msra.mxu0 %v1070
    %1381 = vmatpush.bf16.msra.mxu0 %v1063
    %1382 = vmatpush.bf16.msra.mxu0 %v1056
    %1383 = vmatmul.bf16.gmra.mxu0 %v175
    %v1384 = vpop.f32.mrf.mxu0
    %v1385 = vadd.f32 %v1372, %v1384
    %v1386 = vpop.f32.mrf.mxu0
    %1387 = vdwg.mxu0
    %1388 = vmatpush.bf16.msra.mxu0 0
    %1389 = vmatpush.bf16.msra.mxu0 0
    %1390 = vmatpush.bf16.msra.mxu0 0
    %1391 = vmatpush.bf16.msra.mxu0 0
    %1392 = vmatpush.bf16.msra.mxu0 0
    %1393 = vmatpush.bf16.msra.mxu0 0
    %1394 = vmatpush.bf16.msra.mxu0 0
    %1395 = vmatpush.bf16.msra.mxu0 %v1112
    %1396 = vmatmul.bf16.gmra.mxu0 %v1295
    %v1397 = vpop.f32.mrf.mxu0
    %v1398 = vadd.f32 %v1385, %v1397
    %v1399 = vpop.f32.mrf.mxu0
    %1400 = vdwg.mxu0
    %1401 = vmatpush.bf16.msra.mxu0 %v994
    %1402 = vmatpush.bf16.msra.mxu0 %v987
    %1403 = vmatpush.bf16.msra.mxu0 %v980
    %1404 = vmatpush.bf16.msra.mxu0 %v973
    %1405 = vmatpush.bf16.msra.mxu0 %v966
    %1406 = vmatpush.bf16.msra.mxu0 %v959
    %1407 = vmatpush.bf16.msra.mxu0 %v952
    %1408 = vmatpush.bf16.msra.mxu0 %v945
    %1409 = vmatmul.bf16.gmra.mxu0 %v173
    %v1410 = vpop.f32.mrf.mxu0
    %v1411 = vadd.f32 %v381, %v1410
    %v1412 = vpop.f32.mrf.mxu0
    %1413 = vdwg.mxu0
    %1414 = vmatpush.bf16.msra.mxu0 %v1050
    %1415 = vmatpush.bf16.msra.mxu0 %v1043
    %1416 = vmatpush.bf16.msra.mxu0 %v1036
    %1417 = vmatpush.bf16.msra.mxu0 %v1029
    %1418 = vmatpush.bf16.msra.mxu0 %v1022
    %1419 = vmatpush.bf16.msra.mxu0 %v1015
    %1420 = vmatpush.bf16.msra.mxu0 %v1008
    %1421 = vmatpush.bf16.msra.mxu0 %v1001
    %1422 = vmatmul.bf16.gmra.mxu0 %v174
    %v1423 = vpop.f32.mrf.mxu0
    %v1424 = vadd.f32 %v1411, %v1423
    %v1425 = vpop.f32.mrf.mxu0
    %1426 = vdwg.mxu0
    %1427 = vmatpush.bf16.msra.mxu0 %v1106
    %1428 = vmatpush.bf16.msra.mxu0 %v1099
    %1429 = vmatpush.bf16.msra.mxu0 %v1092
    %1430 = vmatpush.bf16.msra.mxu0 %v1085
    %1431 = vmatpush.bf16.msra.mxu0 %v1078
    %1432 = vmatpush.bf16.msra.mxu0 %v1071
    %1433 = vmatpush.bf16.msra.mxu0 %v1064
    %1434 = vmatpush.bf16.msra.mxu0 %v1057
    %1435 = vmatmul.bf16.gmra.mxu0 %v175
    %v1436 = vpop.f32.mrf.mxu0
    %v1437 = vadd.f32 %v1424, %v1436
    %v1438 = vpop.f32.mrf.mxu0
    %1439 = vdwg.mxu0
    %1440 = vmatpush.bf16.msra.mxu0 0
    %1441 = vmatpush.bf16.msra.mxu0 0
    %1442 = vmatpush.bf16.msra.mxu0 0
    %1443 = vmatpush.bf16.msra.mxu0 0
    %1444 = vmatpush.bf16.msra.mxu0 0
    %1445 = vmatpush.bf16.msra.mxu0 0
    %1446 = vmatpush.bf16.msra.mxu0 0
    %1447 = vmatpush.bf16.msra.mxu0 %v1113
    %1448 = vmatmul.bf16.gmra.mxu0 %v1295
    %v1449 = vpop.f32.mrf.mxu0
    %v1450 = vadd.f32 %v1437, %v1449
    %v1451 = vpop.f32.mrf.mxu0
    %1452 = vdwg.mxu0
    %1453 = vmatpush.bf16.msra.mxu0 %v995
    %1454 = vmatpush.bf16.msra.mxu0 %v988
    %1455 = vmatpush.bf16.msra.mxu0 %v981
    %1456 = vmatpush.bf16.msra.mxu0 %v974
    %1457 = vmatpush.bf16.msra.mxu0 %v967
    %1458 = vmatpush.bf16.msra.mxu0 %v960
    %1459 = vmatpush.bf16.msra.mxu0 %v953
    %1460 = vmatpush.bf16.msra.mxu0 %v946
    %1461 = vmatmul.bf16.gmra.mxu0 %v173
    %v1462 = vpop.f32.mrf.mxu0
    %v1463 = vadd.f32 %v382, %v1462
    %v1464 = vpop.f32.mrf.mxu0
    %1465 = vdwg.mxu0
    %1466 = vmatpush.bf16.msra.mxu0 %v1051
    %1467 = vmatpush.bf16.msra.mxu0 %v1044
    %1468 = vmatpush.bf16.msra.mxu0 %v1037
    %1469 = vmatpush.bf16.msra.mxu0 %v1030
    %1470 = vmatpush.bf16.msra.mxu0 %v1023
    %1471 = vmatpush.bf16.msra.mxu0 %v1016
    %1472 = vmatpush.bf16.msra.mxu0 %v1009
    %1473 = vmatpush.bf16.msra.mxu0 %v1002
    %1474 = vmatmul.bf16.gmra.mxu0 %v174
    %v1475 = vpop.f32.mrf.mxu0
    %v1476 = vadd.f32 %v1463, %v1475
    %v1477 = vpop.f32.mrf.mxu0
    %1478 = vdwg.mxu0
    %1479 = vmatpush.bf16.msra.mxu0 %v1107
    %1480 = vmatpush.bf16.msra.mxu0 %v1100
    %1481 = vmatpush.bf16.msra.mxu0 %v1093
    %1482 = vmatpush.bf16.msra.mxu0 %v1086
    %1483 = vmatpush.bf16.msra.mxu0 %v1079
    %1484 = vmatpush.bf16.msra.mxu0 %v1072
    %1485 = vmatpush.bf16.msra.mxu0 %v1065
    %1486 = vmatpush.bf16.msra.mxu0 %v1058
    %1487 = vmatmul.bf16.gmra.mxu0 %v175
    %v1488 = vpop.f32.mrf.mxu0
    %v1489 = vadd.f32 %v1476, %v1488
    %v1490 = vpop.f32.mrf.mxu0
    %1491 = vdwg.mxu0
    %1492 = vmatpush.bf16.msra.mxu0 0
    %1493 = vmatpush.bf16.msra.mxu0 0
    %1494 = vmatpush.bf16.msra.mxu0 0
    %1495 = vmatpush.bf16.msra.mxu0 0
    %1496 = vmatpush.bf16.msra.mxu0 0
    %1497 = vmatpush.bf16.msra.mxu0 0
    %1498 = vmatpush.bf16.msra.mxu0 0
    %1499 = vmatpush.bf16.msra.mxu0 %v1114
    %1500 = vmatmul.bf16.gmra.mxu0 %v1295
    %v1501 = vpop.f32.mrf.mxu0
    %v1502 = vadd.f32 %v1489, %v1501
    %v1503 = vpop.f32.mrf.mxu0
    %1504 = vdwg.mxu0
    %1505 = vmatpush.bf16.msra.mxu0 %v996
    %1506 = vmatpush.bf16.msra.mxu0 %v989
    %1507 = vmatpush.bf16.msra.mxu0 %v982
    %1508 = vmatpush.bf16.msra.mxu0 %v975
    %1509 = vmatpush.bf16.msra.mxu0 %v968
    %1510 = vmatpush.bf16.msra.mxu0 %v961
    %1511 = vmatpush.bf16.msra.mxu0 %v954
    %1512 = vmatpush.bf16.msra.mxu0 %v947
    %1513 = vmatmul.bf16.gmra.mxu0 %v173
    %v1514 = vpop.f32.mrf.mxu0
    %v1515 = vadd.f32 %v383, %v1514
    %v1516 = vpop.f32.mrf.mxu0
    %1517 = vdwg.mxu0
    %1518 = vmatpush.bf16.msra.mxu0 %v1052
    %1519 = vmatpush.bf16.msra.mxu0 %v1045
    %1520 = vmatpush.bf16.msra.mxu0 %v1038
    %1521 = vmatpush.bf16.msra.mxu0 %v1031
    %1522 = vmatpush.bf16.msra.mxu0 %v1024
    %1523 = vmatpush.bf16.msra.mxu0 %v1017
    %1524 = vmatpush.bf16.msra.mxu0 %v1010
    %1525 = vmatpush.bf16.msra.mxu0 %v1003
    %1526 = vmatmul.bf16.gmra.mxu0 %v174
    %v1527 = vpop.f32.mrf.mxu0
    %v1528 = vadd.f32 %v1515, %v1527
    %v1529 = vpop.f32.mrf.mxu0
    %1530 = vdwg.mxu0
    %1531 = vmatpush.bf16.msra.mxu0 %v1108
    %1532 = vmatpush.bf16.msra.mxu0 %v1101
    %1533 = vmatpush.bf16.msra.mxu0 %v1094
    %1534 = vmatpush.bf16.msra.mxu0 %v1087
    %1535 = vmatpush.bf16.msra.mxu0 %v1080
    %1536 = vmatpush.bf16.msra.mxu0 %v1073
    %1537 = vmatpush.bf16.msra.mxu0 %v1066
    %1538 = vmatpush.bf16.msra.mxu0 %v1059
    %1539 = vmatmul.bf16.gmra.mxu0 %v175
    %v1540 = vpop.f32.mrf.mxu0
    %v1541 = vadd.f32 %v1528, %v1540
    %v1542 = vpop.f32.mrf.mxu0
    %1543 = vdwg.mxu0
    %1544 = vmatpush.bf16.msra.mxu0 0
    %1545 = vmatpush.bf16.msra.mxu0 0
    %1546 = vmatpush.bf16.msra.mxu0 0
    %1547 = vmatpush.bf16.msra.mxu0 0
    %1548 = vmatpush.bf16.msra.mxu0 0
    %1549 = vmatpush.bf16.msra.mxu0 0
    %1550 = vmatpush.bf16.msra.mxu0 0
    %1551 = vmatpush.bf16.msra.mxu0 %v1115
    %1552 = vmatmul.bf16.gmra.mxu0 %v1295
    %v1553 = vpop.f32.mrf.mxu0
    %v1554 = vadd.f32 %v1541, %v1553
    %v1555 = vpop.f32.mrf.mxu0
    %1556 = vdwg.mxu0
    %1557 = vmatpush.bf16.msra.mxu0 %v997
    %1558 = vmatpush.bf16.msra.mxu0 %v990
    %1559 = vmatpush.bf16.msra.mxu0 %v983
    %1560 = vmatpush.bf16.msra.mxu0 %v976
    %1561 = vmatpush.bf16.msra.mxu0 %v969
    %1562 = vmatpush.bf16.msra.mxu0 %v962
    %1563 = vmatpush.bf16.msra.mxu0 %v955
    %1564 = vmatpush.bf16.msra.mxu0 %v948
    %1565 = vmatmul.bf16.gmra.mxu0 %v173
    %v1566 = vpop.f32.mrf.mxu0
    %v1567 = vadd.f32 %v384, %v1566
    %v1568 = vpop.f32.mrf.mxu0
    %1569 = vdwg.mxu0
    %1570 = vmatpush.bf16.msra.mxu0 %v1053
    %1571 = vmatpush.bf16.msra.mxu0 %v1046
    %1572 = vmatpush.bf16.msra.mxu0 %v1039
    %1573 = vmatpush.bf16.msra.mxu0 %v1032
    %1574 = vmatpush.bf16.msra.mxu0 %v1025
    %1575 = vmatpush.bf16.msra.mxu0 %v1018
    %1576 = vmatpush.bf16.msra.mxu0 %v1011
    %1577 = vmatpush.bf16.msra.mxu0 %v1004
    %1578 = vmatmul.bf16.gmra.mxu0 %v174
    %v1579 = vpop.f32.mrf.mxu0
    %v1580 = vadd.f32 %v1567, %v1579
    %v1581 = vpop.f32.mrf.mxu0
    %1582 = vdwg.mxu0
    %1583 = vmatpush.bf16.msra.mxu0 %v1109
    %1584 = vmatpush.bf16.msra.mxu0 %v1102
    %1585 = vmatpush.bf16.msra.mxu0 %v1095
    %1586 = vmatpush.bf16.msra.mxu0 %v1088
    %1587 = vmatpush.bf16.msra.mxu0 %v1081
    %1588 = vmatpush.bf16.msra.mxu0 %v1074
    %1589 = vmatpush.bf16.msra.mxu0 %v1067
    %1590 = vmatpush.bf16.msra.mxu0 %v1060
    %1591 = vmatmul.bf16.gmra.mxu0 %v175
    %v1592 = vpop.f32.mrf.mxu0
    %v1593 = vadd.f32 %v1580, %v1592
    %v1594 = vpop.f32.mrf.mxu0
    %1595 = vdwg.mxu0
    %1596 = vmatpush.bf16.msra.mxu0 0
    %1597 = vmatpush.bf16.msra.mxu0 0
    %1598 = vmatpush.bf16.msra.mxu0 0
    %1599 = vmatpush.bf16.msra.mxu0 0
    %1600 = vmatpush.bf16.msra.mxu0 0
    %1601 = vmatpush.bf16.msra.mxu0 0
    %1602 = vmatpush.bf16.msra.mxu0 0
    %1603 = vmatpush.bf16.msra.mxu0 %v1116
    %1604 = vmatmul.bf16.gmra.mxu0 %v1295
    %v1605 = vpop.f32.mrf.mxu0
    %v1606 = vadd.f32 %v1593, %v1605
    %v1607 = vpop.f32.mrf.mxu0
    %1608 = vdwg.mxu0
    %1609 = vmatpush.bf16.msra.mxu0 %v998
    %1610 = vmatpush.bf16.msra.mxu0 %v991
    %1611 = vmatpush.bf16.msra.mxu0 %v984
    %1612 = vmatpush.bf16.msra.mxu0 %v977
    %1613 = vmatpush.bf16.msra.mxu0 %v970
    %1614 = vmatpush.bf16.msra.mxu0 %v963
    %1615 = vmatpush.bf16.msra.mxu0 %v956
    %1616 = vmatpush.bf16.msra.mxu0 %v949
    %1617 = vmatmul.bf16.gmra.mxu0 %v173
    %v1618 = vpop.f32.mrf.mxu0
    %v1619 = vadd.f32 %v385, %v1618
    %v1620 = vpop.f32.mrf.mxu0
    %1621 = vdwg.mxu0
    %1622 = vmatpush.bf16.msra.mxu0 %v1054
    %1623 = vmatpush.bf16.msra.mxu0 %v1047
    %1624 = vmatpush.bf16.msra.mxu0 %v1040
    %1625 = vmatpush.bf16.msra.mxu0 %v1033
    %1626 = vmatpush.bf16.msra.mxu0 %v1026
    %1627 = vmatpush.bf16.msra.mxu0 %v1019
    %1628 = vmatpush.bf16.msra.mxu0 %v1012
    %1629 = vmatpush.bf16.msra.mxu0 %v1005
    %1630 = vmatmul.bf16.gmra.mxu0 %v174
    %v1631 = vpop.f32.mrf.mxu0
    %v1632 = vadd.f32 %v1619, %v1631
    %v1633 = vpop.f32.mrf.mxu0
    %1634 = vdwg.mxu0
    %1635 = vmatpush.bf16.msra.mxu0 %v1110
    %1636 = vmatpush.bf16.msra.mxu0 %v1103
    %1637 = vmatpush.bf16.msra.mxu0 %v1096
    %1638 = vmatpush.bf16.msra.mxu0 %v1089
    %1639 = vmatpush.bf16.msra.mxu0 %v1082
    %1640 = vmatpush.bf16.msra.mxu0 %v1075
    %1641 = vmatpush.bf16.msra.mxu0 %v1068
    %1642 = vmatpush.bf16.msra.mxu0 %v1061
    %1643 = vmatmul.bf16.gmra.mxu0 %v175
    %v1644 = vpop.f32.mrf.mxu0
    %v1645 = vadd.f32 %v1632, %v1644
    %v1646 = vpop.f32.mrf.mxu0
    %1647 = vdwg.mxu0
    %1648 = vmatpush.bf16.msra.mxu0 0
    %1649 = vmatpush.bf16.msra.mxu0 0
    %1650 = vmatpush.bf16.msra.mxu0 0
    %1651 = vmatpush.bf16.msra.mxu0 0
    %1652 = vmatpush.bf16.msra.mxu0 0
    %1653 = vmatpush.bf16.msra.mxu0 0
    %1654 = vmatpush.bf16.msra.mxu0 0
    %1655 = vmatpush.bf16.msra.mxu0 %v1117
    %1656 = vmatmul.bf16.gmra.mxu0 %v1295
    %v1657 = vpop.f32.mrf.mxu0
    %v1658 = vadd.f32 %v1645, %v1657
    %v1659 = vpop.f32.mrf.mxu0
    %1660 = vdwg.mxu0
    %v1661 = vmax.f32 %v1346, -30.0
    %v1662 = vmax.f32 %v1398, -30.0
    %v1663 = vmax.f32 %v1450, -30.0
    %v1664 = vmax.f32 %v1502, -30.0
    %v1665 = vmax.f32 %v1554, -30.0
    %v1666 = vmax.f32 %v1606, -30.0
    %v1667 = vmax.f32 %v1658, -30.0
    %v1668 = vmin.f32 %v1661, 30.0
    %v1669 = vmin.f32 %v1662, 30.0
    %v1670 = vmin.f32 %v1663, 30.0
    %v1671 = vmin.f32 %v1664, 30.0
    %v1672 = vmin.f32 %v1665, 30.0
    %v1673 = vmin.f32 %v1666, 30.0
    %v1674 = vmin.f32 %v1667, 30.0
    %v1675 = vsub.f32 0.0, %v1668
    %v1676 = vsub.f32 0.0, %v1669
    %v1677 = vsub.f32 0.0, %v1670
    %v1678 = vsub.f32 0.0, %v1671
    %v1679 = vsub.f32 0.0, %v1672
    %v1680 = vsub.f32 0.0, %v1673
    %v1681 = vsub.f32 0.0, %v1674
    %v1682 = vmul.f32 %v1675, 1.442695
    %v1683 = vpow.pop %v1682
    %v1684 = vmul.f32 %v1676, 1.442695
    %v1685 = vpow.pop %v1684
    %v1686 = vmul.f32 %v1677, 1.442695
    %v1687 = vpow.pop %v1686
    %v1688 = vmul.f32 %v1678, 1.442695
    %v1689 = vpow.pop %v1688
    %v1690 = vmul.f32 %v1679, 1.442695
    %v1691 = vpow.pop %v1690
    %v1692 = vmul.f32 %v1680, 1.442695
    %v1693 = vpow.pop %v1692
    %v1694 = vmul.f32 %v1681, 1.442695
    %v1695 = vpow.pop %v1694
    %v1696 = vadd.f32 %v1683, 1.0
    %v1697 = vadd.f32 %v1685, 1.0
    %v1698 = vadd.f32 %v1687, 1.0
    %v1699 = vadd.f32 %v1689, 1.0
    %v1700 = vadd.f32 %v1691, 1.0
    %v1701 = vadd.f32 %v1693, 1.0
    %v1702 = vadd.f32 %v1695, 1.0
    %v1703 = vrcp.pop %v1696
    %v1704 = vrcp.pop %v1697
    %v1705 = vrcp.pop %v1698
    %v1706 = vrcp.pop %v1699
    %v1707 = vrcp.pop %v1700
    %v1708 = vrcp.pop %v1701
    %v1709 = vrcp.pop %v1702
    %v1710 = vpack.c.bf16 %v1704, %v1703
    %v1711 = vpack.c.bf16 %v1706, %v1705
    %v1712 = vpack.c.bf16 %v1708, %v1707
    %v1713 = vpack.c.bf16 %v1709, %v1709
    %1714 = vst [vmem:[%s5] sm:$0xff] %v1710
    %1715 = vst [vmem:[%s5 + $0x8] sm:$0xff] %v1711
    %1716 = vst [vmem:[%s5 + $0x10] sm:$0xff] %v1712
    %vm1717 = vcmask 125952
    %1718 = vst.msk [vmem:[%s5 + $0x18] sm:$0xf] %vm1717, %v1713
    // Predicated region
    $region30: #{decoder_forward.1} parent=1 // pred_check
      _
    $region31: #{decoder_forward.1} parent=1 // pred_check_branch
      %1720 = sbr.rel (0) target = $region33
    $region32: #{decoder_forward.1} parent=1 // pred_region
      _
    $region33: #{decoder_forward.1} parent=1 // pred_fallthru
      _
    // Predicated region
    $region34: #{decoder_forward.1} parent=1 // pred_check
      _
    $region35: #{decoder_forward.1} parent=1 // pred_check_branch
      %1722 = sbr.rel (0) target = $region37
    $region36: #{decoder_forward.1} parent=1 // pred_region
      _
    $region37: #{decoder_forward.1} parent=1 // pred_fallthru
      _
    %1723 = vsyncpa [#allocation3], 1
    %1724 = vsyncpa [#allocation5], 1

</llo_original>
